<compile_context>
chip_gen: v5e
topology: v5e:2x2
jax: 0.10.0
libtpu: 0.0.40
codegen_flags: <defaults>
</compile_context>

<pallas_src>
import jax
import jax.numpy as jnp
from jax.experimental import pallas as pl
from jax.experimental.pallas import tpu as pltpu


def _calib_kernel_lanes(p_ref, inv_t_ref, w_ref, g_ref, o_ref):
    # p_ref: (tb, 128) -- each 128-lane row holds 128//C consecutive samples,
    # class index = lane % C.  Everything here is lane-dense.
    p = p_ref[...].astype(jnp.float32)
    # probs ** (1/T) == exp(log(p) / T); probs come from a softmax (> 0).
    # NOTE: class_weights stay a plain VPU multiply (not folded into the
    # exponent as exp(log p / T + log w)) so non-positive weights keep the
    # reference semantics; the multiply is fully hidden under the HBM stream.
    cal = jnp.exp(jnp.log(p) * inv_t_ref[...]) * w_ref[...]            # (tb, 128)
    # Per-sample denominator, broadcast over each C-lane group, via one MXU
    # matmul against a constant block-diagonal ones matrix.  Row-local, so
    # garbage rows of a ragged last block cannot contaminate valid rows.
    denom = jnp.dot(cal, g_ref[...], preferred_element_type=jnp.float32)
    # Exact reciprocal (approx=True would cost ~1e-4 rel. error and an EUP slot).
    o_ref[...] = (cal * pl.reciprocal(denom, approx=False)).astype(o_ref.dtype)


def _calib_kernel_classes_on_sublanes(p_ref, inv_t_ref, w_ref, o_ref):
    # Fallback layout: (C, tb) -- classes on sublanes, batch on lanes.
    p = p_ref[...].astype(jnp.float32)
    cal = jnp.exp(jnp.log(p) * inv_t_ref[...]) * w_ref[...]            # (C, tb)
    denom = jnp.sum(cal, axis=0, keepdims=True)        # per-lane sublane reduce
    o_ref[...] = (cal * pl.reciprocal(denom, approx=False)).astype(o_ref.dtype)


def probability_calibration(probs, temperature, class_weights,
                            *, target_tile_bytes=2 << 20):
    """probs: (B, C); temperature/class_weights: (C,). Returns (B, C) in probs.dtype."""
    B, C = probs.shape
    dtype = probs.dtype

    # Hoist parameter prep out of the kernel loop (tiny, computed once).
    inv_t = 1.0 / temperature.astype(jnp.float32)
    w = class_weights.astype(jnp.float32)

    compiler_params = pltpu.CompilerParams(
        dimension_semantics=("parallel",),
        vmem_limit_bytes=32 * 1024 * 1024,
    )

    if 128 % C == 0:
        # -------- fast path: natural layout, no transposes --------
        reps = 128 // C
        n = B * C
        # Pad the flat element count to a multiple of 128 lanes (and >= 8 rows
        # so blocks are standard (8,128) tiles).  Pad value 1.0 stays finite and
        # confined to its own C-lane group; padded outputs are sliced off below.
        n_pad = max(pl.cdiv(n, 128) * 128, 8 * 128)
        flat = probs.reshape(-1)                         # free row-major reshape
        if n_pad != n:
            flat = jnp.pad(flat, (0, n_pad - n), constant_values=1.0)
        rows = n_pad // 128
        x = flat.reshape(rows, 128)                      # free lane-dense view

        # Streamed tile: ~target_tile_bytes of f32-equivalent rows, multiple of 8.
        tb = max((target_tile_bytes // (128 * 4)) // 8 * 8, 8)
        if tb >= rows:
            tb = rows                                    # single full-extent block

        inv_t_l = jnp.tile(inv_t, reps).reshape(1, 128)  # 1/T per lane
        w_l = jnp.tile(w, reps).reshape(1, 128)          # weight per lane
        lane = jnp.arange(128, dtype=jnp.int32)
        group_ones = (lane[:, None] // C == lane[None, :] // C).astype(jnp.float32)

        out = pl.pallas_call(
            _calib_kernel_lanes,
            out_shape=jax.ShapeDtypeStruct((rows, 128), dtype),
            grid=(pl.cdiv(rows, tb),),                   # ragged last block OK
            in_specs=[
                pl.BlockSpec((tb, 128), lambda i: (i, 0)),   # streamed probs tile
                pl.BlockSpec((1, 128), lambda i: (0, 0)),    # 1/T (resident)
                pl.BlockSpec((1, 128), lambda i: (0, 0)),    # weights (resident)
                pl.BlockSpec((128, 128), lambda i: (0, 0)),  # block-diag ones (resident)
            ],
            out_specs=pl.BlockSpec((tb, 128), lambda i: (i, 0)),
            compiler_params=compiler_params,
        )(x, inv_t_l, w_l, group_ones)

        out_flat = out.reshape(-1)
        if n_pad != n:
            out_flat = out_flat[:n]
        return out_flat.reshape(B, C)

    # -------- fallback (C does not divide 128): lane-dense (C, B) layout --------
    # The two transposes cost extra HBM passes but keep every vector op and
    # every output store lane-dense for arbitrary num_classes.
    x = probs.T
    tb = max((target_tile_bytes // (C * 4)) // 128 * 128, 128)
    if tb >= B:
        tb = B
    out = pl.pallas_call(
        _calib_kernel_classes_on_sublanes,
        out_shape=jax.ShapeDtypeStruct((C, B), dtype),
        grid=(pl.cdiv(B, tb),),                          # ragged last block OK
        in_specs=[
            pl.BlockSpec((C, tb), lambda i: (0, i)),
            pl.BlockSpec((C, 1), lambda i: (0, 0)),
            pl.BlockSpec((C, 1), lambda i: (0, 0)),
        ],
        out_specs=pl.BlockSpec((C, tb), lambda i: (0, i)),
        compiler_params=compiler_params,
    )(x, inv_t.reshape(C, 1), w.reshape(C, 1))
    return out.T


def probability_calibration_ref(probs, temperature, class_weights):
    cal = probs.astype(jnp.float32) ** (1.0 / temperature[None, :])
    cal = cal * class_weights[None, :]
    return (cal / cal.sum(axis=1, keepdims=True)).astype(probs.dtype)


if __name__ == "__main__":
    num_classes = 8
    batch = 4
    init_temperature = 1.5

    # Deterministic parameter init per the module's __init__:
    #   temperature   = ones(num_classes) * temperature
    #   class_weights = ones(num_classes)
    temperature = jnp.ones((num_classes,), jnp.float32) * init_temperature
    class_weights = jnp.ones((num_classes,), jnp.float32)

    key = jax.random.PRNGKey(0)
    logits = jax.random.normal(key, (batch, num_classes), dtype=jnp.float32)
    probs = jax.nn.softmax(logits, axis=1)  # valid probability input (strictly > 0)

    out = jax.block_until_ready(
        probability_calibration(probs, temperature, class_weights))
    ref = probability_calibration_ref(probs, temperature, class_weights)

    assert out.shape == (batch, num_classes)
    assert jnp.allclose(out, ref, atol=1e-5, rtol=1e-5), (out, ref)

    print("KERNEL_OK")
</pallas_src>

<mosaic_0001>
module attributes {stable_mosaic.version = 11 : i64} {
  func.func @_calib_kernel_lanes(%arg0: i32, %arg1: memref<8x128xf32, #tpu.memory_space<vmem>>, %arg2: memref<1x128xf32, #tpu.memory_space<vmem>>, %arg3: memref<1x128xf32, #tpu.memory_space<vmem>>, %arg4: memref<128x128xf32, #tpu.memory_space<vmem>>, %arg5: memref<8x128xf32, #tpu.memory_space<vmem>>) attributes {dimension_semantics = [#tpu.dimension_semantics<parallel>], iteration_bounds = array<i64: 1>, scalar_prefetch = 0 : i64, scratch_operands = 0 : i64, tpu.core_type = #tpu.core_type<tc>, window_params = [{transform_indices = @transform_0, window_bounds = array<i64: 8, 128>}, {pipeline_mode = #tpu.pipeline_mode<synchronous>, transform_indices = @transform_1, window_bounds = array<i64: 1, 128>}, {pipeline_mode = #tpu.pipeline_mode<synchronous>, transform_indices = @transform_2, window_bounds = array<i64: 1, 128>}, {pipeline_mode = #tpu.pipeline_mode<synchronous>, transform_indices = @transform_3, window_bounds = array<i64: 128, 128>}, {transform_indices = @transform_4, window_bounds = array<i64: 8, 128>}]} {
    %c0 = arith.constant 0 : index
    %c0_0 = arith.constant 0 : index
    %0 = vector.load %arg1[%c0, %c0_0] : memref<8x128xf32, #tpu.memory_space<vmem>>, vector<8x128xf32>
    %1 = math.log %0 : vector<8x128xf32>
    %c0_1 = arith.constant 0 : index
    %c0_2 = arith.constant 0 : index
    %2 = vector.load %arg2[%c0_1, %c0_2] : memref<1x128xf32, #tpu.memory_space<vmem>>, vector<1x128xf32>
    %3 = vector.broadcast %2 : vector<1x128xf32> to vector<8x128xf32>
    %4 = arith.mulf %1, %3 : vector<8x128xf32>
    %5 = math.exp %4 : vector<8x128xf32>
    %c0_3 = arith.constant 0 : index
    %c0_4 = arith.constant 0 : index
    %6 = vector.load %arg3[%c0_3, %c0_4] : memref<1x128xf32, #tpu.memory_space<vmem>>, vector<1x128xf32>
    %7 = vector.broadcast %6 : vector<1x128xf32> to vector<8x128xf32>
    %8 = arith.mulf %5, %7 : vector<8x128xf32>
    %c0_5 = arith.constant 0 : index
    %c0_6 = arith.constant 0 : index
    %9 = vector.load %arg4[%c0_5, %c0_6] : memref<128x128xf32, #tpu.memory_space<vmem>>, vector<128x128xf32>
    %cst = arith.constant dense<0.000000e+00> : vector<8x128xf32>
    %10 = tpu.matmul %8, %9, %cst {dimension_numbers = #tpu.dot_dimension_numbers<[1], [0], [0], [1], [0, 0, 1, 1], [], []>} : vector<8x128xf32>, vector<128x128xf32>, vector<8x128xf32> -> vector<8x128xf32>
    %11 = tpu.reciprocal %10 : vector<8x128xf32> -> vector<8x128xf32>
    %12 = arith.mulf %8, %11 : vector<8x128xf32>
    %c0_7 = arith.constant 0 : index
    %c0_8 = arith.constant 0 : index
    %13 = vector.load %arg5[%c0_7, %c0_8] : memref<8x128xf32, #tpu.memory_space<vmem>>, vector<8x128xf32>
    tpu.vector_store %arg5[%c0_7, %c0_8], %12 {strides = array<i32>} : memref<8x128xf32, #tpu.memory_space<vmem>>, vector<8x128xf32>,
    return
  }
  func.func @transform_0(%arg0: i32) -> (i32, i32) {
    %c0_i32 = arith.constant 0 : i32
    %c0_i32_0 = arith.constant 0 : i32
    return %arg0, %c0_i32 : i32, i32
  }
  func.func @transform_1(%arg0: i32) -> (i32, i32) {
    %c0_i32 = arith.constant 0 : i32
    %c0_i32_0 = arith.constant 0 : i32
    %c0_i32_1 = arith.constant 0 : i32
    return %c0_i32, %c0_i32_0 : i32, i32
  }
  func.func @transform_2(%arg0: i32) -> (i32, i32) {
    %c0_i32 = arith.constant 0 : i32
    %c0_i32_0 = arith.constant 0 : i32
    %c0_i32_1 = arith.constant 0 : i32
    return %c0_i32, %c0_i32_0 : i32, i32
  }
  func.func @transform_3(%arg0: i32) -> (i32, i32) {
    %c0_i32 = arith.constant 0 : i32
    %c0_i32_0 = arith.constant 0 : i32
    %c0_i32_1 = arith.constant 0 : i32
    return %c0_i32, %c0_i32_0 : i32, i32
  }
  func.func @transform_4(%arg0: i32) -> (i32, i32) {
    %c0_i32 = arith.constant 0 : i32
    %c0_i32_0 = arith.constant 0 : i32
    return %arg0, %c0_i32 : i32, i32
  }
}

</mosaic_0001>

<llo_original>
// kernel: tpu_custom_call.1
$region0: #{tpu_custom_call.1}
  #allocation0 [shape = 'u32[]', space=smem, size = 0x4, offset = 0x4, fixed_abs, tag = 'smem constant byte address 0x4 - core index']
  #allocation1 [shape = 'u32[72,128]{1,0:T(1,128)}', space=vmem, size = 0x9000, scoped, tag = 'internal scratch']
  %s0 = inlined_call_operand.hbm [shape: f32[8,128], index: 0, kind: input, shape index: {}]
  %s1 = inlined_call_operand.hbm [shape: f32[1,128], index: 1, kind: input, shape index: {}]
  %s2 = inlined_call_operand.vmem [shape: f32[1,128], index: 2, kind: input, shape index: {}]
  %s3 = inlined_call_operand.hbm [shape: f32[128,128], index: 3, kind: input, shape index: {}]
  %s4 = inlined_call_operand.hbm [shape: f32[8,128], index: 4, kind: output, shape index: {}]
  %s5 = sld [smem:[#allocation0]]
  $region38: #{tpu_custom_call.1} parent=0
    _
  %s7 = ssub.s32 1, %s5
  %s8 = scalar_select 0, %s7, %s5
  $region1: #{tpu_custom_call.1} parent=0
    #allocation2 [shape = 'u8[4096]{0}', space=vmem, size = 0x1000, scoped, tag = 'input window, operand 0, single buffered']
    #allocation3 [shape = 's32[1]{0}', space=sflag, size = 0x4, scoped, tag = 'scoped memory for tpu_custom_call.1']
    #allocation4 [shape = 's32[1]{0}', space=sflag, size = 0x4, scoped, tag = 'scoped memory for tpu_custom_call.1']
    #allocation5 [shape = 'u8[512]{0}', space=vmem, size = 0x400, scoped, tag = 'input window, operand 1, single buffered']
    #allocation6 [shape = 's32[1]{0}', space=sflag, size = 0x4, scoped, tag = 'scoped memory for tpu_custom_call.1']
    #allocation7 [shape = 'u8[65536]{0}', space=vmem, size = 0x10000, scoped, tag = 'input window, operand 3, single buffered']
    #allocation8 [shape = 'u8[4096]{0}', space=vmem, size = 0x1000, scoped, tag = 'output window, operand 0, single buffered']
    %9 = vsyncpa [#allocation3], 0
    %10 = vsyncpa [#allocation6], 0
    %11 = vsyncpa [#allocation4], 0
    // Predicated region
    $region2: #{tpu_custom_call.1} parent=1 // pred_check
      _
    $region3: #{tpu_custom_call.1} parent=1 // pred_check_branch
      %13 = sbr.rel (0) target = $region5
    $region4: #{tpu_custom_call.1} parent=1 // pred_region
      %15 = vsyncadd [#allocation3], 0
      %s17 = sshll.u32 %s0, 4
      %s18 = int_to_ptr.hbm [resolvable:$true] %s17
      %s19 = sshll.u32 [#allocation2], 4
      %s20 = int_to_ptr.vmem [resolvable:$true] %s19
      %22 = dma.hbm_to_vmem [thread:$0]  %s18, 128, %s20, [#allocation3]
    $region5: #{tpu_custom_call.1} parent=1 // pred_fallthru
      _
    // Predicated region
    $region6: #{tpu_custom_call.1} parent=1 // pred_check
      _
    $region7: #{tpu_custom_call.1} parent=1 // pred_check_branch
      %24 = sbr.rel (0) target = $region9
    $region8: #{tpu_custom_call.1} parent=1 // pred_region
      %26 = vsyncadd [#allocation6], 0
      %s28 = sshll.u32 %s1, 4
      %s29 = int_to_ptr.hbm [resolvable:$true] %s28
      %s30 = sshll.u32 [#allocation5], 4
      %s31 = int_to_ptr.vmem [resolvable:$true] %s30
      %33 = dma.hbm_to_vmem [thread:$0]  %s29, 16, %s31, [#allocation6]
    $region9: #{tpu_custom_call.1} parent=1 // pred_fallthru
      _
    // Predicated region
    $region10: #{tpu_custom_call.1} parent=1 // pred_check
      _
    $region11: #{tpu_custom_call.1} parent=1 // pred_check_branch
      %35 = sbr.rel (0) target = $region13
    $region12: #{tpu_custom_call.1} parent=1 // pred_region
      _
    $region13: #{tpu_custom_call.1} parent=1 // pred_fallthru
      _
    // Predicated region
    $region14: #{tpu_custom_call.1} parent=1 // pred_check
      _
    $region15: #{tpu_custom_call.1} parent=1 // pred_check_branch
      %37 = sbr.rel (0) target = $region17
    $region16: #{tpu_custom_call.1} parent=1 // pred_region
      %39 = vsyncadd [#allocation6], 0
      %s40 = sshll.u32 %s3, 4
      %s41 = int_to_ptr.hbm [resolvable:$true] %s40
      %s42 = sshll.u32 [#allocation7], 4
      %s43 = int_to_ptr.vmem [resolvable:$true] %s42
      %48 = dma.hbm_to_vmem [thread:$0]  %s41, 2048, %s43, [#allocation6], 128, 128, 8
    $region17: #{tpu_custom_call.1} parent=1 // pred_fallthru
      _
    // Predicated region
    $region18: #{tpu_custom_call.1} parent=1 // pred_check
      _
    $region19: #{tpu_custom_call.1} parent=1 // pred_check_branch
      %50 = sbr.rel (0) target = $region21
    $region20: #{tpu_custom_call.1} parent=1 // pred_region
      %52 = dma.done [#allocation3], 128
    $region21: #{tpu_custom_call.1} parent=1 // pred_fallthru
      _
    // Predicated region
    $region22: #{tpu_custom_call.1} parent=1 // pred_check
      _
    $region23: #{tpu_custom_call.1} parent=1 // pred_check_branch
      %54 = sbr.rel (0) target = $region25
    $region24: #{tpu_custom_call.1} parent=1 // pred_region
      %56 = dma.done [#allocation6], 16
    $region25: #{tpu_custom_call.1} parent=1 // pred_fallthru
      _
    // Predicated region
    $region26: #{tpu_custom_call.1} parent=1 // pred_check
      _
    $region27: #{tpu_custom_call.1} parent=1 // pred_check_branch
      %58 = sbr.rel (0) target = $region29
    $region28: #{tpu_custom_call.1} parent=1 // pred_region
      %60 = dma.done [#allocation6], 2048
    $region29: #{tpu_custom_call.1} parent=1 // pred_fallthru
      _
    %v61 = vld [vmem:[#allocation2] sm:$0xff]
    %v62 = vlog2.pop %v61
    %v63 = vmul.f32 %v62, 0.6931472
    %v64 = vld [vmem:[#allocation5] sm:$0x1]
    %v66 = vperm.slane %v64, 0
    %v68 = vmul.f32 %v63, %v66
    %v69 = vmul.f32 %v68, 1.442695
    %v70 = vpow.pop %v69
    %v71 = vld [vmem:[%s2] sm:$0x1]
    %v73 = vperm.slane %v71, 0
    %v75 = vmul.f32 %v70, %v73
    %v76 = vld [vmem:[#allocation7] sm:$0xff]
    %v77 = vld [vmem:[#allocation7 + $0x8] sm:$0xff]
    %v78 = vld [vmem:[#allocation7 + $0x10] sm:$0xff]
    %v79 = vld [vmem:[#allocation7 + $0x18] sm:$0xff]
    %v80 = vld [vmem:[#allocation7 + $0x20] sm:$0xff]
    %v81 = vld [vmem:[#allocation7 + $0x28] sm:$0xff]
    %v82 = vld [vmem:[#allocation7 + $0x30] sm:$0xff]
    %v83 = vld [vmem:[#allocation7 + $0x38] sm:$0xff]
    %v84 = vld [vmem:[#allocation7 + $0x40] sm:$0xff]
    %v85 = vld [vmem:[#allocation7 + $0x48] sm:$0xff]
    %v86 = vld [vmem:[#allocation7 + $0x50] sm:$0xff]
    %v87 = vld [vmem:[#allocation7 + $0x58] sm:$0xff]
    %v88 = vld [vmem:[#allocation7 + $0x60] sm:$0xff]
    %v89 = vld [vmem:[#allocation7 + $0x68] sm:$0xff]
    %v90 = vld [vmem:[#allocation7 + $0x70] sm:$0xff]
    %v91 = vld [vmem:[#allocation7 + $0x78] sm:$0xff]
    %92 = vmatpush.msra.mxu0 %v91
    %93 = vmatpush.msra.mxu0 %v90
    %94 = vmatpush.msra.mxu0 %v89
    %95 = vmatpush.msra.mxu0 %v88
    %96 = vmatpush.msra.mxu0 %v87
    %97 = vmatpush.msra.mxu0 %v86
    %98 = vmatpush.msra.mxu0 %v85
    %99 = vmatpush.msra.mxu0 %v84
    %100 = vmatpush.msra.mxu0 %v83
    %101 = vmatpush.msra.mxu0 %v82
    %102 = vmatpush.msra.mxu0 %v81
    %103 = vmatpush.msra.mxu0 %v80
    %104 = vmatpush.msra.mxu0 %v79
    %105 = vmatpush.msra.mxu0 %v78
    %106 = vmatpush.msra.mxu0 %v77
    %107 = vmatpush.msra.mxu0 %v76
    %108 = vmatmul.f32.gmra.mxu0 %v75
    %v109 = vpop.f32.mrf.mxu0
    %v110 = vadd.f32 0.0, %v109
    %111 = vdwg.mxu0
    %v112 = vrcp.pop %v110
    %v113 = vmul.f32 %v110, %v112
    %v114 = vsub.f32 1.0, %v113
    %v115 = vmul.f32 %v112, %v114
    %v116 = vadd.f32 %v112, %v115
    %vm117 = vweird.f32 %v110
    %vm118 = vweird.f32 %v112
    %vm119 = vmor %vm117, %vm118
    %v120 = vsel %vm119, %v112, %v116
    %v121 = vand.u32 2147483647, %v110
    %vm122 = vcmp.eq.f32.partialorder %v121, 8.507059e+37
    %v123 = vand.u32 %v110, 2147483648
    %v124 = vor.u32 1.1754944e-38, %v123
    %v125 = vsel %vm122, %v124, %v120
    %v126 = vmul.f32 %v75, %v125
    %127 = vst [vmem:[#allocation8] sm:$0xff] %v126
    // Predicated region
    $region30: #{tpu_custom_call.1} parent=1 // pred_check
      _
    $region31: #{tpu_custom_call.1} parent=1 // pred_check_branch
      %129 = sbr.rel (0) target = $region33
    $region32: #{tpu_custom_call.1} parent=1 // pred_region
      %131 = vsyncadd [#allocation4], 0
      %s133 = sshll.u32 [#allocation8], 4
      %s134 = int_to_ptr.vmem [resolvable:$true] %s133
      %s135 = sshll.u32 %s4, 4
      %s136 = int_to_ptr.hbm [resolvable:$true] %s135
      %138 = dma.vmem_to_hbm [thread:$0]  %s134, 128, %s136, [#allocation4]
    $region33: #{tpu_custom_call.1} parent=1 // pred_fallthru
      _
    // Predicated region
    $region34: #{tpu_custom_call.1} parent=1 // pred_check
      _
    $region35: #{tpu_custom_call.1} parent=1 // pred_check_branch
      %140 = sbr.rel (0) target = $region37
    $region36: #{tpu_custom_call.1} parent=1 // pred_region
      %142 = dma.done [#allocation4], 128
    $region37: #{tpu_custom_call.1} parent=1 // pred_fallthru
      _
    %143 = vsyncpa [#allocation3], 1
    %144 = vsyncpa [#allocation6], 1
    %145 = vsyncpa [#allocation4], 1

</llo_original>
